<compile_context>
chip_gen: v7x
topology: tpu7x:2x2x1
jax: 0.10.0
libtpu: 0.0.40
codegen_flags: <defaults>
</compile_context>

<pallas_src>
import jax
import jax.numpy as jnp
from jax.experimental import pallas as pl
from jax.experimental.pallas import tpu as pltpu

_LANE = 128


def _affine_kernel(scale_ref, bias_ref, x_ref, o_ref):
    # scale_ref, bias_ref: SMEM (2, C) f32 scalar-prefetch tables.
    # x_ref, o_ref:        VMEM (2, C, R, 128) lane-dense tiles covering all
    #                      2*C (stream, channel) planes for one slab of rows.
    n_streams, n_channels = x_ref.shape[0], x_ref.shape[1]
    for s in range(n_streams):           # static unroll: 2*C scalar FMAs
        for c in range(n_channels):
            y = x_ref[s, c] * scale_ref[s, c] + bias_ref[s, c]
            o_ref[s, c] = y.astype(o_ref.dtype)


def _choose_tile_rows(rows, tile_rows):
    """Pick R (rows of 128 lanes per grid step).

    R must be a multiple of 8 or equal to `rows` (Pallas (8,128) block rule)
    and must divide `rows` exactly so no row padding / ragged tail is needed.
    Prefers >=2 grid steps (v7x megacore sharding) when alignment allows.
    Returns None if no aligned tiling exists (caller falls back to XLA).
    """
    if rows <= tile_rows:
        half = rows // 2
        if rows % 2 == 0 and half >= 8 and half % 8 == 0:
            return half                   # 2 tiles -> shards across v7x's 2 TCs
        return rows                       # single full-extent tile
    r = (tile_rows // 8) * 8
    while r >= 8:
        if rows % r == 0:
            return r
        r -= 8
    return None


def apply_separate_transforms(image, rgb_mean, rgb_std, depth_mean, depth_std,
                              *, tile_rows=1024):
    """image: (2, C, H, W) float32 (stream 0 = rgb, stream 1 = depth).

    Returns (2*C, H, W), equal to
    torch.cat([normalize_rgb(image[0]), normalize_depth(image[1])], dim=0).
    """
    two, C, H, W = image.shape
    assert two == 2, "expected image[0]=rgb, image[1]=depth stacked on dim 0"
    HW = H * W

    # Fold Normalize into y = x * scale + bias (per stream, per channel).
    # (One extra rounding vs. subtract-then-divide; within 1e-5 of PyTorch.)
    mean = jnp.stack([rgb_mean, depth_mean], axis=0).astype(jnp.float32)   # (2, C)
    std = jnp.stack([rgb_std, depth_std], axis=0).astype(jnp.float32)      # (2, C)
    scale = 1.0 / std
    bias = -mean / std

    R = _choose_tile_rows(HW // _LANE, tile_rows) if HW % _LANE == 0 else None
    if R is None:
        # TODO(synk): handle HW % 128 != 0 with an in-kernel masked tail; the
        # fused XLA fallback avoids the ~3x HBM cost of wrapper pad + slice.
        sc = scale.astype(image.dtype)[:, :, None, None]
        bi = bias.astype(image.dtype)[:, :, None, None]
        return (image * sc + bi).reshape(2 * C, H, W)

    rows = HW // _LANE
    n_tiles = rows // R
    x = image.reshape(2, C, rows, _LANE)   # contiguous row-major: free reshape

    block_bytes = 2 * C * R * _LANE * jnp.dtype(image.dtype).itemsize
    # in + out, each double-buffered, plus slack; never the whole physical VMEM.
    vmem_limit = max(16 << 20, 4 * block_bytes + (4 << 20))

    out = pl.pallas_call(
        _affine_kernel,
        out_shape=jax.ShapeDtypeStruct((2, C, rows, _LANE), image.dtype),
        grid_spec=pltpu.PrefetchScalarGridSpec(
            num_scalar_prefetch=2,          # scale, bias -> SMEM
            grid=(n_tiles,),
            in_specs=[
                pl.BlockSpec(
                    (2, C, R, _LANE),
                    lambda t, scale_r, bias_r: (0, 0, t, 0),
                ),
            ],
            out_specs=pl.BlockSpec(
                (2, C, R, _LANE),
                lambda t, scale_r, bias_r: (0, 0, t, 0),
            ),
        ),
        compiler_params=pltpu.CompilerParams(
            dimension_semantics=("parallel",),
            vmem_limit_bytes=vmem_limit,
        ),
    )(scale, bias, x)

    # Restore (2*C, H, W) == torch.cat([rgb, depth], dim=0); free reshape.
    return out.reshape(2 * C, H, W)


def _reference(image, rgb_mean, rgb_std, depth_mean, depth_std):
    rgb = (image[0] - rgb_mean[:, None, None]) / rgb_std[:, None, None]
    depth = (image[1] - depth_mean[:, None, None]) / depth_std[:, None, None]
    return jnp.concatenate([rgb, depth], axis=0)


if __name__ == "__main__":
    key = jax.random.PRNGKey(0)
    C = 3

    rgb_mean = jnp.array([0.485, 0.456, 0.406], dtype=jnp.float32)
    rgb_std = jnp.array([0.229, 0.224, 0.225], dtype=jnp.float32)
    depth_mean = jnp.array([0.5, 0.5, 0.5], dtype=jnp.float32)
    depth_std = jnp.array([0.25, 0.25, 0.25], dtype=jnp.float32)

    # (H, W): single-tile aligned, multi-tile aligned (2 tiles), and the
    # misaligned XLA-fallback path.
    cases = [(16, 16), (64, 64), (10, 10)]
    for H, W in cases:
        key, sub = jax.random.split(key)
        image = jax.random.uniform(sub, (2, C, H, W), dtype=jnp.float32)

        out = apply_separate_transforms(
            image, rgb_mean, rgb_std, depth_mean, depth_std
        )
        out = jax.block_until_ready(out)

        ref = _reference(image, rgb_mean, rgb_std, depth_mean, depth_std)
        assert out.shape == (2 * C, H, W), (out.shape, (2 * C, H, W))
        assert jnp.allclose(out, ref, atol=1e-5, rtol=1e-5), (
            f"mismatch at H={H} W={W}"
        )

    print("KERNEL_OK")
</pallas_src>

<mosaic_0001>
module attributes {stable_mosaic.version = 11 : i64} {
  func.func @_affine_kernel(%arg0: i32, %arg1: memref<2x3xf32, #tpu.memory_space<smem>>, %arg2: memref<2x3xf32, #tpu.memory_space<smem>>, %arg3: memref<2x3x2x128xf32, #tpu.memory_space<vmem>>, %arg4: memref<2x3x2x128xf32, #tpu.memory_space<vmem>>) attributes {dimension_semantics = [#tpu.dimension_semantics<parallel>], iteration_bounds = array<i64: 1>, scalar_prefetch = 2 : i64, scratch_operands = 0 : i64, tpu.core_type = #tpu.core_type<tc>, window_params = [{transform_indices = @transform_0, window_bounds = array<i64: 2, 3, 2, 128>}, {transform_indices = @transform_1, window_bounds = array<i64: 2, 3, 2, 128>}]} {
    %c0 = arith.constant 0 : index
    %c0_0 = arith.constant 0 : index
    %c0_1 = arith.constant 0 : index
    %c0_2 = arith.constant 0 : index
    %0 = vector.load %arg3[%c0, %c0_0, %c0_1, %c0_2] : memref<2x3x2x128xf32, #tpu.memory_space<vmem>>, vector<1x1x2x128xf32>
    %1 = vector.shape_cast %0 : vector<1x1x2x128xf32> to vector<2x128xf32>
    %c0_3 = arith.constant 0 : index
    %c0_4 = arith.constant 0 : index
    %2 = memref.load %arg1[%c0_3, %c0_4] : memref<2x3xf32, #tpu.memory_space<smem>>
    %3 = vector.broadcast %2 : f32 to vector<2x128xf32>
    %4 = arith.mulf %1, %3 : vector<2x128xf32>
    %c0_5 = arith.constant 0 : index
    %c0_6 = arith.constant 0 : index
    %5 = memref.load %arg2[%c0_5, %c0_6] : memref<2x3xf32, #tpu.memory_space<smem>>
    %6 = vector.broadcast %5 : f32 to vector<2x128xf32>
    %7 = arith.addf %4, %6 : vector<2x128xf32>
    %c0_7 = arith.constant 0 : index
    %c0_8 = arith.constant 0 : index
    %c0_9 = arith.constant 0 : index
    %c0_10 = arith.constant 0 : index
    %8 = vector.load %arg4[%c0_7, %c0_8, %c0_9, %c0_10] : memref<2x3x2x128xf32, #tpu.memory_space<vmem>>, vector<1x1x2x128xf32>
    %9 = vector.shape_cast %8 : vector<1x1x2x128xf32> to vector<2x128xf32>
    %10 = vector.shape_cast %7 : vector<2x128xf32> to vector<1x1x2x128xf32>
    tpu.vector_store %arg4[%c0_7, %c0_8, %c0_9, %c0_10], %10 {strides = array<i32>} : memref<2x3x2x128xf32, #tpu.memory_space<vmem>>, vector<1x1x2x128xf32>,
    %c0_11 = arith.constant 0 : index
    %c1 = arith.constant 1 : index
    %c0_12 = arith.constant 0 : index
    %c0_13 = arith.constant 0 : index
    %11 = vector.load %arg3[%c0_11, %c1, %c0_12, %c0_13] : memref<2x3x2x128xf32, #tpu.memory_space<vmem>>, vector<1x1x2x128xf32>
    %12 = vector.shape_cast %11 : vector<1x1x2x128xf32> to vector<2x128xf32>
    %c0_14 = arith.constant 0 : index
    %c1_15 = arith.constant 1 : index
    %13 = memref.load %arg1[%c0_14, %c1_15] : memref<2x3xf32, #tpu.memory_space<smem>>
    %14 = vector.broadcast %13 : f32 to vector<2x128xf32>
    %15 = arith.mulf %12, %14 : vector<2x128xf32>
    %c0_16 = arith.constant 0 : index
    %c1_17 = arith.constant 1 : index
    %16 = memref.load %arg2[%c0_16, %c1_17] : memref<2x3xf32, #tpu.memory_space<smem>>
    %17 = vector.broadcast %16 : f32 to vector<2x128xf32>
    %18 = arith.addf %15, %17 : vector<2x128xf32>
    %c0_18 = arith.constant 0 : index
    %c1_19 = arith.constant 1 : index
    %c0_20 = arith.constant 0 : index
    %c0_21 = arith.constant 0 : index
    %19 = vector.load %arg4[%c0_18, %c1_19, %c0_20, %c0_21] : memref<2x3x2x128xf32, #tpu.memory_space<vmem>>, vector<1x1x2x128xf32>
    %20 = vector.shape_cast %19 : vector<1x1x2x128xf32> to vector<2x128xf32>
    %21 = vector.shape_cast %18 : vector<2x128xf32> to vector<1x1x2x128xf32>
    tpu.vector_store %arg4[%c0_18, %c1_19, %c0_20, %c0_21], %21 {strides = array<i32>} : memref<2x3x2x128xf32, #tpu.memory_space<vmem>>, vector<1x1x2x128xf32>,
    %c0_22 = arith.constant 0 : index
    %c2 = arith.constant 2 : index
    %c0_23 = arith.constant 0 : index
    %c0_24 = arith.constant 0 : index
    %22 = vector.load %arg3[%c0_22, %c2, %c0_23, %c0_24] : memref<2x3x2x128xf32, #tpu.memory_space<vmem>>, vector<1x1x2x128xf32>
    %23 = vector.shape_cast %22 : vector<1x1x2x128xf32> to vector<2x128xf32>
    %c0_25 = arith.constant 0 : index
    %c2_26 = arith.constant 2 : index
    %24 = memref.load %arg1[%c0_25, %c2_26] : memref<2x3xf32, #tpu.memory_space<smem>>
    %25 = vector.broadcast %24 : f32 to vector<2x128xf32>
    %26 = arith.mulf %23, %25 : vector<2x128xf32>
    %c0_27 = arith.constant 0 : index
    %c2_28 = arith.constant 2 : index
    %27 = memref.load %arg2[%c0_27, %c2_28] : memref<2x3xf32, #tpu.memory_space<smem>>
    %28 = vector.broadcast %27 : f32 to vector<2x128xf32>
    %29 = arith.addf %26, %28 : vector<2x128xf32>
    %c0_29 = arith.constant 0 : index
    %c2_30 = arith.constant 2 : index
    %c0_31 = arith.constant 0 : index
    %c0_32 = arith.constant 0 : index
    %30 = vector.load %arg4[%c0_29, %c2_30, %c0_31, %c0_32] : memref<2x3x2x128xf32, #tpu.memory_space<vmem>>, vector<1x1x2x128xf32>
    %31 = vector.shape_cast %30 : vector<1x1x2x128xf32> to vector<2x128xf32>
    %32 = vector.shape_cast %29 : vector<2x128xf32> to vector<1x1x2x128xf32>
    tpu.vector_store %arg4[%c0_29, %c2_30, %c0_31, %c0_32], %32 {strides = array<i32>} : memref<2x3x2x128xf32, #tpu.memory_space<vmem>>, vector<1x1x2x128xf32>,
    %c1_33 = arith.constant 1 : index
    %c0_34 = arith.constant 0 : index
    %c0_35 = arith.constant 0 : index
    %c0_36 = arith.constant 0 : index
    %33 = vector.load %arg3[%c1_33, %c0_34, %c0_35, %c0_36] : memref<2x3x2x128xf32, #tpu.memory_space<vmem>>, vector<1x1x2x128xf32>
    %34 = vector.shape_cast %33 : vector<1x1x2x128xf32> to vector<2x128xf32>
    %c1_37 = arith.constant 1 : index
    %c0_38 = arith.constant 0 : index
    %35 = memref.load %arg1[%c1_37, %c0_38] : memref<2x3xf32, #tpu.memory_space<smem>>
    %36 = vector.broadcast %35 : f32 to vector<2x128xf32>
    %37 = arith.mulf %34, %36 : vector<2x128xf32>
    %c1_39 = arith.constant 1 : index
    %c0_40 = arith.constant 0 : index
    %38 = memref.load %arg2[%c1_39, %c0_40] : memref<2x3xf32, #tpu.memory_space<smem>>
    %39 = vector.broadcast %38 : f32 to vector<2x128xf32>
    %40 = arith.addf %37, %39 : vector<2x128xf32>
    %c1_41 = arith.constant 1 : index
    %c0_42 = arith.constant 0 : index
    %c0_43 = arith.constant 0 : index
    %c0_44 = arith.constant 0 : index
    %41 = vector.load %arg4[%c1_41, %c0_42, %c0_43, %c0_44] : memref<2x3x2x128xf32, #tpu.memory_space<vmem>>, vector<1x1x2x128xf32>
    %42 = vector.shape_cast %41 : vector<1x1x2x128xf32> to vector<2x128xf32>
    %43 = vector.shape_cast %40 : vector<2x128xf32> to vector<1x1x2x128xf32>
    tpu.vector_store %arg4[%c1_41, %c0_42, %c0_43, %c0_44], %43 {strides = array<i32>} : memref<2x3x2x128xf32, #tpu.memory_space<vmem>>, vector<1x1x2x128xf32>,
    %c1_45 = arith.constant 1 : index
    %c1_46 = arith.constant 1 : index
    %c0_47 = arith.constant 0 : index
    %c0_48 = arith.constant 0 : index
    %44 = vector.load %arg3[%c1_45, %c1_46, %c0_47, %c0_48] : memref<2x3x2x128xf32, #tpu.memory_space<vmem>>, vector<1x1x2x128xf32>
    %45 = vector.shape_cast %44 : vector<1x1x2x128xf32> to vector<2x128xf32>
    %c1_49 = arith.constant 1 : index
    %c1_50 = arith.constant 1 : index
    %46 = memref.load %arg1[%c1_49, %c1_50] : memref<2x3xf32, #tpu.memory_space<smem>>
    %47 = vector.broadcast %46 : f32 to vector<2x128xf32>
    %48 = arith.mulf %45, %47 : vector<2x128xf32>
    %c1_51 = arith.constant 1 : index
    %c1_52 = arith.constant 1 : index
    %49 = memref.load %arg2[%c1_51, %c1_52] : memref<2x3xf32, #tpu.memory_space<smem>>
    %50 = vector.broadcast %49 : f32 to vector<2x128xf32>
    %51 = arith.addf %48, %50 : vector<2x128xf32>
    %c1_53 = arith.constant 1 : index
    %c1_54 = arith.constant 1 : index
    %c0_55 = arith.constant 0 : index
    %c0_56 = arith.constant 0 : index
    %52 = vector.load %arg4[%c1_53, %c1_54, %c0_55, %c0_56] : memref<2x3x2x128xf32, #tpu.memory_space<vmem>>, vector<1x1x2x128xf32>
    %53 = vector.shape_cast %52 : vector<1x1x2x128xf32> to vector<2x128xf32>
    %54 = vector.shape_cast %51 : vector<2x128xf32> to vector<1x1x2x128xf32>
    tpu.vector_store %arg4[%c1_53, %c1_54, %c0_55, %c0_56], %54 {strides = array<i32>} : memref<2x3x2x128xf32, #tpu.memory_space<vmem>>, vector<1x1x2x128xf32>,
    %c1_57 = arith.constant 1 : index
    %c2_58 = arith.constant 2 : index
    %c0_59 = arith.constant 0 : index
    %c0_60 = arith.constant 0 : index
    %55 = vector.load %arg3[%c1_57, %c2_58, %c0_59, %c0_60] : memref<2x3x2x128xf32, #tpu.memory_space<vmem>>, vector<1x1x2x128xf32>
    %56 = vector.shape_cast %55 : vector<1x1x2x128xf32> to vector<2x128xf32>
    %c1_61 = arith.constant 1 : index
    %c2_62 = arith.constant 2 : index
    %57 = memref.load %arg1[%c1_61, %c2_62] : memref<2x3xf32, #tpu.memory_space<smem>>
    %58 = vector.broadcast %57 : f32 to vector<2x128xf32>
    %59 = arith.mulf %56, %58 : vector<2x128xf32>
    %c1_63 = arith.constant 1 : index
    %c2_64 = arith.constant 2 : index
    %60 = memref.load %arg2[%c1_63, %c2_64] : memref<2x3xf32, #tpu.memory_space<smem>>
    %61 = vector.broadcast %60 : f32 to vector<2x128xf32>
    %62 = arith.addf %59, %61 : vector<2x128xf32>
    %c1_65 = arith.constant 1 : index
    %c2_66 = arith.constant 2 : index
    %c0_67 = arith.constant 0 : index
    %c0_68 = arith.constant 0 : index
    %63 = vector.load %arg4[%c1_65, %c2_66, %c0_67, %c0_68] : memref<2x3x2x128xf32, #tpu.memory_space<vmem>>, vector<1x1x2x128xf32>
    %64 = vector.shape_cast %63 : vector<1x1x2x128xf32> to vector<2x128xf32>
    %65 = vector.shape_cast %62 : vector<2x128xf32> to vector<1x1x2x128xf32>
    tpu.vector_store %arg4[%c1_65, %c2_66, %c0_67, %c0_68], %65 {strides = array<i32>} : memref<2x3x2x128xf32, #tpu.memory_space<vmem>>, vector<1x1x2x128xf32>,
    return
  }
  func.func @transform_0(%arg0: i32, %arg1: memref<2x3xf32, #tpu.memory_space<smem>>, %arg2: memref<2x3xf32, #tpu.memory_space<smem>>) -> (i32, i32, i32, i32) {
    %c0_i32 = arith.constant 0 : i32
    %c0_i32_0 = arith.constant 0 : i32
    %c0_i32_1 = arith.constant 0 : i32
    %c0_i32_2 = arith.constant 0 : i32
    return %c0_i32, %c0_i32_0, %arg0, %c0_i32_1 : i32, i32, i32, i32
  }
  func.func @transform_1(%arg0: i32, %arg1: memref<2x3xf32, #tpu.memory_space<smem>>, %arg2: memref<2x3xf32, #tpu.memory_space<smem>>) -> (i32, i32, i32, i32) {
    %c0_i32 = arith.constant 0 : i32
    %c0_i32_0 = arith.constant 0 : i32
    %c0_i32_1 = arith.constant 0 : i32
    %c0_i32_2 = arith.constant 0 : i32
    return %c0_i32, %c0_i32_0, %arg0, %c0_i32_1 : i32, i32, i32, i32
  }
}

</mosaic_0001>

<llo_original>
// kernel: tpu_custom_call.1
$region0: #{tpu_custom_call.1}
  #allocation0 [shape = 'u32[]', space=smem, size = 0x4, offset = 0x4, fixed_abs, tag = 'smem constant byte address 0x4 - core index']
  #allocation1 [shape = 'u32[144,128]{1,0:T(1,128)}', space=vmem, size = 0x12000, scoped, tag = 'internal scratch']
  #allocation2 [shape = 's32[1]{0}', space=sflag, size = 0x4, scoped, tag = 'scoped memory for tpu_custom_call.1']
  #allocation3 [shape = 'u8[1024]{0}', space=smem, size = 0x400, scoped, tag = 'prefetched SMEM operand 0']
  #allocation4 [shape = 'u8[1024]{0}', space=smem, size = 0x400, scoped, tag = 'prefetched SMEM operand 1']
  %s0 = inlined_call_operand.hbm [shape: f32[2,3], index: 0, kind: input, shape index: {}]
  %s1 = inlined_call_operand.vmem [shape: f32[2,3], index: 1, kind: input, shape index: {}]
  %s2 = inlined_call_operand.hbm [shape: f32[2,3,2,128], index: 2, kind: input, shape index: {}]
  %s3 = inlined_call_operand.hbm [shape: f32[2,3,2,128], index: 3, kind: output, shape index: {}]
  %s4 = sld [smem:[#allocation0]]
  $region18: #{tpu_custom_call.1} parent=0
    _
  %s6 = ssub.s32 1, %s4
  %s7 = scalar_select 0, %s6, %s4
  %9 = dma.hbm_to_smem %s0, 32, [#allocation3], [#allocation2]
  %s10 = sshll.u32 %s1, 4
  %s11 = int_to_ptr.vmem [resolvable:$true] %s10
  %13 = dma.vmem_to_smem %s11, 32, [#allocation4], [#allocation2]
  %14 = dma.done [#allocation2], 64
  %15 = sfence
  $region1: #{tpu_custom_call.1} parent=0
    #allocation5 [shape = 'u8[6144]{0}', space=vmem, size = 0x1800, scoped, tag = 'input window, operand 2, single buffered']
    #allocation6 [shape = 's32[1]{0}', space=sflag, size = 0x4, scoped, tag = 'scoped memory for tpu_custom_call.1']
    #allocation7 [shape = 's32[1]{0}', space=sflag, size = 0x4, scoped, tag = 'scoped memory for tpu_custom_call.1']
    #allocation8 [shape = 'u8[6144]{0}', space=vmem, size = 0x1800, scoped, tag = 'output window, operand 0, single buffered']
    %16 = vsyncpa [#allocation6], 0
    %17 = vsyncpa [#allocation7], 0
    // Predicated region
    $region2: #{tpu_custom_call.1} parent=1 // pred_check
      _
    $region3: #{tpu_custom_call.1} parent=1 // pred_check_branch
      %19 = sbr.rel (0) target = $region5
    $region4: #{tpu_custom_call.1} parent=1 // pred_region
      %s21 = ssub.s32 192, 192
      %22 = vsyncadd [#allocation6], %s21
      %s23 = sshll.u32 [#allocation5], 4
      %s24 = int_to_ptr.vmem [resolvable:$true] %s23
      %29 = dma.hbm_to_vmem [thread:$0]  %s2, 192, %s24, [#allocation6], 32, 32, 2
    $region5: #{tpu_custom_call.1} parent=1 // pred_fallthru
      _
    // Predicated region
    $region6: #{tpu_custom_call.1} parent=1 // pred_check
      _
    $region7: #{tpu_custom_call.1} parent=1 // pred_check_branch
      %31 = sbr.rel (0) target = $region9
    $region8: #{tpu_custom_call.1} parent=1 // pred_region
      %32 = dma.done [#allocation6], 192
    $region9: #{tpu_custom_call.1} parent=1 // pred_fallthru
      _
    %v33 = vld [vmem:[#allocation5] sm:$0x3]
    %s34 = sld [smem:[#allocation3]]
    %v35 = vstv %s34
    %v36 = vmul.f32 %v33, %v35
    %s37 = sld [smem:[#allocation4]]
    %v38 = vstv %s37
    %v39 = vadd.f32 %v36, %v38
    %40 = vst [vmem:[#allocation8] sm:$0x3] %v39
    %s41 = scalar_lea.vmem [#allocation5], 2
    %v42 = vld [vmem:[%s41] sm:$0x3]
    %s43 = sld [smem:[#allocation3 + $0x1]]
    %v44 = vstv %s43
    %v45 = vmul.f32 %v42, %v44
    %s46 = sld [smem:[#allocation4 + $0x1]]
    %v47 = vstv %s46
    %v48 = vadd.f32 %v45, %v47
    %s49 = scalar_lea.vmem [#allocation8], 2
    %50 = vst [vmem:[%s49] sm:$0x3] %v48
    %s51 = scalar_lea.vmem [#allocation5], 4
    %v52 = vld [vmem:[%s51] sm:$0x3]
    %s53 = sld [smem:[#allocation3 + $0x2]]
    %v54 = vstv %s53
    %v55 = vmul.f32 %v52, %v54
    %s56 = sld [smem:[#allocation4 + $0x2]]
    %v57 = vstv %s56
    %v58 = vadd.f32 %v55, %v57
    %s59 = scalar_lea.vmem [#allocation8], 4
    %60 = vst [vmem:[%s59] sm:$0x3] %v58
    %s61 = scalar_lea.vmem [#allocation5], 6
    %v62 = vld [vmem:[%s61] sm:$0x3]
    %s63 = sld [smem:[#allocation3 + $0x80]]
    %v64 = vstv %s63
    %v65 = vmul.f32 %v62, %v64
    %s66 = sld [smem:[#allocation4 + $0x80]]
    %v67 = vstv %s66
    %v68 = vadd.f32 %v65, %v67
    %s69 = scalar_lea.vmem [#allocation8], 6
    %70 = vst [vmem:[%s69] sm:$0x3] %v68
    %s71 = scalar_lea.vmem [#allocation5], 8
    %v72 = vld [vmem:[%s71] sm:$0x3]
    %s73 = sld [smem:[#allocation3 + $0x81]]
    %v74 = vstv %s73
    %v75 = vmul.f32 %v72, %v74
    %s76 = sld [smem:[#allocation4 + $0x81]]
    %v77 = vstv %s76
    %v78 = vadd.f32 %v75, %v77
    %s79 = scalar_lea.vmem [#allocation8], 8
    %80 = vst [vmem:[%s79] sm:$0x3] %v78
    %s81 = scalar_lea.vmem [#allocation5], 10
    %v82 = vld [vmem:[%s81] sm:$0x3]
    %s83 = sld [smem:[#allocation3 + $0x82]]
    %v84 = vstv %s83
    %v85 = vmul.f32 %v82, %v84
    %s86 = sld [smem:[#allocation4 + $0x82]]
    %v87 = vstv %s86
    %v88 = vadd.f32 %v85, %v87
    %s89 = scalar_lea.vmem [#allocation8], 10
    %90 = vst [vmem:[%s89] sm:$0x3] %v88
    // Predicated region
    $region10: #{tpu_custom_call.1} parent=1 // pred_check
      _
    $region11: #{tpu_custom_call.1} parent=1 // pred_check_branch
      %92 = sbr.rel (0) target = $region13
    $region12: #{tpu_custom_call.1} parent=1 // pred_region
      %s94 = ssub.s32 192, 192
      %95 = vsyncadd [#allocation7], %s94
      %s96 = sshll.u32 [#allocation8], 4
      %s97 = int_to_ptr.vmem [resolvable:$true] %s96
      %102 = dma.vmem_to_hbm [thread:$0]  %s97, 192, %s3, [#allocation7], 32, 32, 2
    $region13: #{tpu_custom_call.1} parent=1 // pred_fallthru
      _
    // Predicated region
    $region14: #{tpu_custom_call.1} parent=1 // pred_check
      _
    $region15: #{tpu_custom_call.1} parent=1 // pred_check_branch
      %104 = sbr.rel (0) target = $region17
    $region16: #{tpu_custom_call.1} parent=1 // pred_region
      %105 = dma.done [#allocation7], 192
    $region17: #{tpu_custom_call.1} parent=1 // pred_fallthru
      _
    %106 = vsyncpa [#allocation6], 1
    %107 = vsyncpa [#allocation7], 1

</llo_original>
